<compile_context>
chip_gen: v5e
topology: v5e:2x2
jax: 0.10.0
libtpu: 0.0.40
codegen_flags: <defaults>
</compile_context>

<pallas_src>
import numpy as np
import jax
import jax.numpy as jnp
from jax.experimental import pallas as pl
from jax.experimental.pallas import tpu as pltpu

try:  # fast C implementation if available
    from scipy.optimize import linear_sum_assignment as _scipy_lsa
except Exception:  # pragma: no cover
    _scipy_lsa = None

# module-level constants from the reference script
COST_CLASS = 1.0
COST_BBOX = 5.0   # bbox_loss_coef
COST_GIOU = 2.0   # giou_loss_coef
EOS_COEF = 0.1

_NEG_INF = -1e9


def _round_up(x, m):
    return ((x + m - 1) // m) * m


def _vmem_limit_bytes():
    """Generation-aware scoped-VMEM limit (v7x has 64 MiB physical; v5e/v6e 128 MiB)."""
    try:
        cap = int(pltpu.get_tpu_info().vmem_capacity_bytes)
        return max(32 * 1024 * 1024, min(cap // 2, 100 * 1024 * 1024))
    except Exception:
        return 32 * 1024 * 1024


# ---------------------------------------------------------------------------
# Kernel 1: Hungarian matching cost matrix (tiled over N, lane-dense over T)
#   logits : [tile_n, C_pad]  f32 (padded classes = -1e9)
#   qfeat  : [tile_n, 16]     f32 (cx,cy,w,h,x0,y0,x1,y1,area, pad)
#   onehot : [C_pad, T_pad]   f32 (one-hot of target labels, zero pad)
#   tfeat  : [16, T_pad]      f32 (cx,cy,w,h,x0,y0,x1,y1,area, pad)
# ---------------------------------------------------------------------------
def _cost_matrix_kernel(logits_ref, qfeat_ref, onehot_ref, tfeat_ref, c_ref):
    logits = logits_ref[...]
    m = jnp.max(logits, axis=-1, keepdims=True)
    e = jnp.exp(logits - m)
    prob = e / jnp.sum(e, axis=-1, keepdims=True)            # exact per-row softmax

    # out_prob[:, tgt_ids] expressed as an f32 MXU matmul against the one-hot
    prob_at_tgt = jnp.dot(prob, onehot_ref[...],
                          preferred_element_type=jnp.float32)  # [tile_n, T_pad]

    q = qfeat_ref[...]            # [tile_n, 16]
    t = tfeat_ref[...]            # [16, T_pad]

    # cost_bbox = torch.cdist(out_bbox, tgt_bbox, p=1); start with k=0 term
    cost_bbox = jnp.abs(q[:, 0:1] - t[0:1, :])
    for k in range(1, 4):
        cost_bbox = cost_bbox + jnp.abs(q[:, k:k + 1] - t[k:k + 1, :])

    b1x0, b1y0, b1x1, b1y1, area1 = (q[:, 4:5], q[:, 5:6], q[:, 6:7],
                                     q[:, 7:8], q[:, 8:9])
    b2x0, b2y0, b2x1, b2y1, area2 = (t[4:5, :], t[5:6, :], t[6:7, :],
                                     t[7:8, :], t[8:9, :])

    iw = jnp.maximum(jnp.minimum(b1x1, b2x1) - jnp.maximum(b1x0, b2x0), 0.0)
    ih = jnp.maximum(jnp.minimum(b1y1, b2y1) - jnp.maximum(b1y0, b2y0), 0.0)
    inter = iw * ih                                     # [tile_n, T_pad]
    union = area1 + area2 - inter
    iou = inter * pl.reciprocal(union, approx=True)     # EUP recip, not VALU divide

    ew = jnp.maximum(jnp.maximum(b1x1, b2x1) - jnp.minimum(b1x0, b2x0), 0.0)
    eh = jnp.maximum(jnp.maximum(b1y1, b2y1) - jnp.minimum(b1y0, b2y0), 0.0)
    enc = ew * eh
    giou = iou - (enc - union) * pl.reciprocal(enc, approx=True)

    # scales folded directly into the single output accumulation
    c_ref[...] = (COST_BBOX * cost_bbox - COST_CLASS * prob_at_tgt
                  - COST_GIOU * giou)


# ---------------------------------------------------------------------------
# Kernel 2a: per-tile partial cross-entropy sums (weight=None, fill_value=0
# as in the provided reference).  Grid axis is parallel; reduce in wrapper.
# ---------------------------------------------------------------------------
def _make_ce_kernel(n_valid, tile_n):
    def _ce_kernel(logits_ref, tclass_ref, partial_ref):
        pid = pl.program_id(0)
        logits = logits_ref[...]                       # [tile_n, C_pad]
        tc = tclass_ref[...]                           # [tile_n, 1] int32
        c_pad = logits.shape[-1]

        m = jnp.max(logits, axis=-1, keepdims=True)
        lse = m + jnp.log(jnp.sum(jnp.exp(logits - m), axis=-1, keepdims=True))
        cls_iota = jax.lax.broadcasted_iota(jnp.int32, (tile_n, c_pad), 1)
        picked = jnp.sum(jnp.where(cls_iota == tc, logits, 0.0),
                         axis=-1, keepdims=True)
        row = jax.lax.broadcasted_iota(jnp.int32, (tile_n, 1), 0) + pid * tile_n
        valid = (row < n_valid).astype(jnp.float32)    # mask N padding
        partial_ref[0, 0] = jnp.sum((lse - picked) * valid)

    return _ce_kernel


# ---------------------------------------------------------------------------
# Kernel 2b: loss_bbox + loss_giou over matched pairs (single invocation).
# Padded rows use identical dummy boxes on src/tgt -> contribute exactly zero.
# ---------------------------------------------------------------------------
def _make_box_loss_kernel(inv_num_boxes):
    def _box_kernel(src_ref, tgt_ref, bbox_ref, giou_ref):
        s = src_ref[...].astype(jnp.float32)           # [M_pad, 4] cxcywh
        t = tgt_ref[...].astype(jnp.float32)

        bbox_ref[0, 0] = jnp.sum(jnp.abs(s - t)) * inv_num_boxes

        sx0 = s[:, 0:1] - 0.5 * s[:, 2:3]
        sy0 = s[:, 1:2] - 0.5 * s[:, 3:4]
        sx1 = s[:, 0:1] + 0.5 * s[:, 2:3]
        sy1 = s[:, 1:2] + 0.5 * s[:, 3:4]
        tx0 = t[:, 0:1] - 0.5 * t[:, 2:3]
        ty0 = t[:, 1:2] - 0.5 * t[:, 3:4]
        tx1 = t[:, 0:1] + 0.5 * t[:, 2:3]
        ty1 = t[:, 1:2] + 0.5 * t[:, 3:4]

        area1 = (sx1 - sx0) * (sy1 - sy0)
        area2 = (tx1 - tx0) * (ty1 - ty0)
        iw = jnp.maximum(jnp.minimum(sx1, tx1) - jnp.maximum(sx0, tx0), 0.0)
        ih = jnp.maximum(jnp.minimum(sy1, ty1) - jnp.maximum(sy0, ty0), 0.0)
        inter = iw * ih
        union = area1 + area2 - inter
        iou = inter / union                            # exact (tiny, loss value)
        ew = jnp.maximum(jnp.maximum(sx1, tx1) - jnp.minimum(sx0, tx0), 0.0)
        eh = jnp.maximum(jnp.maximum(sy1, ty1) - jnp.minimum(sy0, ty0), 0.0)
        enc = ew * eh
        giou = iou - (enc - union) / enc               # diag of pairwise GIoU
        giou_ref[0, 0] = jnp.sum(1.0 - giou) * inv_num_boxes

    return _box_kernel


# ---------------------------------------------------------------------------
# Host-side Hungarian assignment (scipy if available, else O(n^3) JV fallback)
# ---------------------------------------------------------------------------
def _lsa_fallback(cost):
    """Min-cost assignment of a rectangular cost matrix (JV / shortest
    augmenting path). Returns (row_ind, col_ind), row_ind sorted ascending."""
    cost = np.asarray(cost, dtype=np.float64)
    transposed = cost.shape[0] > cost.shape[1]
    if transposed:
        cost = cost.T
    n, m = cost.shape                                   # n <= m
    inf = 1e18
    u = np.zeros(n + 1, dtype=np.float64)
    v = np.zeros(m + 1, dtype=np.float64)
    p = np.zeros(m + 1, dtype=np.int64)
    way = np.zeros(m + 1, dtype=np.int64)
    for i in range(1, n + 1):
        p[0] = i
        j0 = 0
        minv = np.full(m + 1, inf, dtype=np.float64)
        used = np.zeros(m + 1, dtype=bool)
        while True:
            used[j0] = True
            i0, delta, j1 = p[j0], inf, 0
            for j in range(1, m + 1):
                if used[j]:
                    continue
                cur = cost[i0 - 1, j - 1] - u[i0] - v[j]
                if cur < minv[j]:
                    minv[j] = cur
                    way[j] = j0
                if minv[j] < delta:
                    delta = minv[j]
                    j1 = j
            for j in range(m + 1):
                if used[j]:
                    u[p[j]] += delta
                    v[j] -= delta
                else:
                    minv[j] -= delta
            j0 = j1
            if p[j0] == 0:
                break
        while True:
            j1 = way[j0]
            p[j0] = p[j1]
            j0 = j1
            if j0 == 0:
                break
    rows, cols = [], []
    for j in range(1, m + 1):
        if p[j] != 0:
            rows.append(p[j] - 1)
            cols.append(j - 1)
    rows = np.asarray(rows, dtype=np.int64)
    cols = np.asarray(cols, dtype=np.int64)
    if transposed:
        rows, cols = cols, rows
    order = np.argsort(rows, kind="stable")
    return rows[order], cols[order]


def _linear_sum_assignment(cost):
    if _scipy_lsa is not None:
        r, c = _scipy_lsa(np.asarray(cost, dtype=np.float64))
        return np.asarray(r, dtype=np.int64), np.asarray(c, dtype=np.int64)
    return _lsa_fallback(cost)


def _hungarian(cost_2d, bs, num_queries, sizes):
    """cost_2d: host numpy [N, total_tgts]; per-image slices are numpy views."""
    indices, start = [], 0
    for b in range(bs):
        sub = cost_2d[b * num_queries:(b + 1) * num_queries,
                      start:start + sizes[b]]
        rows, cols = _linear_sum_assignment(sub)
        indices.append((rows, cols))
        start += sizes[b]
    return indices


# ---------------------------------------------------------------------------
# Wrapper helpers
# ---------------------------------------------------------------------------
def _box_features(boxes):
    """[K, 4] cxcywh -> [K, 16] = (cx, cy, w, h, x0, y0, x1, y1, area, 0...)."""
    cx, cy, w, h = boxes[:, 0], boxes[:, 1], boxes[:, 2], boxes[:, 3]
    x0 = cx - 0.5 * w
    y0 = cy - 0.5 * h
    x1 = cx + 0.5 * w
    y1 = cy + 0.5 * h
    area = (x1 - x0) * (y1 - y0)
    feat = jnp.stack([cx, cy, w, h, x0, y0, x1, y1, area], axis=-1)
    return jnp.pad(feat, ((0, 0), (0, 16 - 9))).astype(jnp.float32)


# ---------------------------------------------------------------------------
# SetCriterion.forward equivalent
# ---------------------------------------------------------------------------
def set_criterion_forward(pred_logits, pred_boxes, targets, *, num_classes):
    bs, num_queries, num_logit_classes = pred_logits.shape
    n_flat = bs * num_queries
    vmem_limit = _vmem_limit_bytes()

    # Buffer of the torch module; unused in this forward path because the
    # provided reference calls F.cross_entropy(..., None) (weight=None).
    empty_weight = jnp.ones((num_classes + 1,), jnp.float32).at[-1].set(EOS_COEF)
    _ = empty_weight

    tgt_labels = jnp.concatenate([t['labels'] for t in targets]).astype(jnp.int32)
    tgt_boxes = jnp.concatenate([t['boxes'] for t in targets],
                                axis=0).astype(jnp.float32)
    sizes = [int(t['labels'].shape[0]) for t in targets]
    total_tgts = int(sum(sizes))

    # ---- padding: lane-dense T, class dim to 128, N to a VMEM-sized tile ----
    t_pad = max(_round_up(total_tgts, 128), 128)
    c_pad = max(128, _round_up(num_logit_classes, 128))

    # size tile_n from the VMEM budget (double-buffered in/out working set)
    budget = vmem_limit // 2
    const_bytes = 2 * (c_pad + 16) * t_pad * 4
    per_row_bytes = 2 * 4 * (t_pad + c_pad + 16)
    tile_cap = max(8, (budget - const_bytes) // per_row_bytes)
    tile_cap = max(8, min((tile_cap // 8) * 8, 2048))
    # NOTE(v7x): if N is large, a grid of >=2 steps lets the "parallel" axis
    # shard across the two TensorCores; tile_cap=2048 keeps that for DETR sizes.
    tile_n = min(tile_cap, _round_up(n_flat, 8))
    n_pad = _round_up(n_flat, tile_n)

    logits_flat = pred_logits.reshape(n_flat, num_logit_classes).astype(jnp.float32)
    boxes_flat = pred_boxes.reshape(n_flat, 4).astype(jnp.float32)

    dummy_box = jnp.array([0.5, 0.5, 1.0, 1.0], jnp.float32)   # positive-area pad

    # logits: pad classes with -1e9 (softmax/CE unchanged), rows with zeros
    logits_p = jnp.pad(logits_flat, ((0, 0), (0, c_pad - num_logit_classes)),
                       constant_values=_NEG_INF)
    logits_p = jnp.pad(logits_p, ((0, n_pad - n_flat), (0, 0)))

    if n_pad > n_flat:
        boxes_p = jnp.concatenate(
            [boxes_flat, jnp.tile(dummy_box[None, :], (n_pad - n_flat, 1))], axis=0)
    else:
        boxes_p = boxes_flat
    qfeat = _box_features(boxes_p)                              # [n_pad, 16]

    if t_pad > total_tgts:
        tgt_boxes_pad = jnp.concatenate(
            [tgt_boxes, jnp.tile(dummy_box[None, :], (t_pad - total_tgts, 1))],
            axis=0)
    else:
        tgt_boxes_pad = tgt_boxes
    tfeat = jnp.transpose(_box_features(tgt_boxes_pad))         # [16, t_pad]

    onehot_ct = (jnp.arange(c_pad, dtype=jnp.int32)[:, None]
                 == tgt_labels[None, :]).astype(jnp.float32)    # [c_pad, T]
    onehot_ct = jnp.pad(onehot_ct, ((0, 0), (0, t_pad - total_tgts)))

    # --- Pallas kernel 1: cost matrix (tiled, pipelined, megacore-parallel) --
    grid1 = (pl.cdiv(n_pad, tile_n),)
    cost = pl.pallas_call(
        _cost_matrix_kernel,
        out_shape=jax.ShapeDtypeStruct((n_pad, t_pad), jnp.float32),
        grid=grid1,
        in_specs=[
            pl.BlockSpec((tile_n, c_pad), lambda i: (i, 0)),
            pl.BlockSpec((tile_n, 16), lambda i: (i, 0)),
            pl.BlockSpec((c_pad, t_pad), lambda i: (0, 0)),
            pl.BlockSpec((16, t_pad), lambda i: (0, 0)),
        ],
        out_specs=pl.BlockSpec((tile_n, t_pad), lambda i: (i, 0)),
        compiler_params=pltpu.CompilerParams(
            dimension_semantics=("parallel",),
            vmem_limit_bytes=vmem_limit),
    )(logits_p, qfeat, onehot_ct, tfeat)

    # single D2H of the padded slab; slicing on host uses numpy views
    cost_host = np.asarray(jax.device_get(cost))
    indices = _hungarian(cost_host, bs, num_queries, sizes)

    # _get_src_permutation_idx (tiny host int arrays)
    batch_idx = np.concatenate(
        [np.full(len(src), i, dtype=np.int64) for i, (src, _) in enumerate(indices)])
    src_idx = np.concatenate([src for src, _ in indices])
    m_total = int(src_idx.shape[0])
    flat_idx = jnp.asarray(batch_idx * num_queries + src_idx, dtype=jnp.int32)

    # matched target classes / boxes gathered on device
    if m_total > 0:
        target_classes_o = jnp.concatenate(
            [t['labels'].astype(jnp.int32)[jnp.asarray(j, dtype=jnp.int32)]
             for t, (_, j) in zip(targets, indices)])
        tgt_boxes_m = jnp.concatenate(
            [t['boxes'].astype(jnp.float32)[jnp.asarray(j, dtype=jnp.int32)]
             for t, (_, j) in zip(targets, indices)], axis=0)       # [M, 4]
        src_boxes = boxes_flat[flat_idx]                            # [M, 4]
        target_classes_flat = (jnp.zeros((n_pad,), jnp.int32)
                               .at[flat_idx].set(target_classes_o))
    else:
        target_classes_o = jnp.zeros((0,), jnp.int32)
        target_classes_flat = jnp.zeros((n_pad,), jnp.int32)

    target_classes = target_classes_flat.reshape(n_pad, 1)

    num_boxes = float(max(float(total_tgts), 1.0))                  # world_size == 1

    smem_scalar = pl.BlockSpec((1, 1), lambda i: (i, 0),
                               memory_space=pltpu.MemorySpace.SMEM)

    # --- Pallas kernel 2a: partial CE sums (parallel grid, reduce in wrapper) -
    grid2 = pl.cdiv(n_pad, tile_n)
    ce_partials = pl.pallas_call(
        _make_ce_kernel(n_flat, tile_n),
        out_shape=jax.ShapeDtypeStruct((grid2, 1), jnp.float32),
        grid=(grid2,),
        in_specs=[
            pl.BlockSpec((tile_n, c_pad), lambda i: (i, 0)),
            pl.BlockSpec((tile_n, 1), lambda i: (i, 0)),
        ],
        out_specs=smem_scalar,
        compiler_params=pltpu.CompilerParams(
            dimension_semantics=("parallel",),
            vmem_limit_bytes=vmem_limit),
    )(logits_p, target_classes)
    loss_ce = jnp.sum(ce_partials) * jnp.float32(1.0 / float(n_flat))

    # --- Pallas kernel 2b: bbox + giou losses over matched pairs -------------
    if m_total > 0:
        m_pad = max(8, _round_up(m_total, 8))
        pad_rows = m_pad - m_total
        if pad_rows > 0:
            pad_blk = jnp.tile(dummy_box[None, :], (pad_rows, 1))
            src_boxes_p = jnp.concatenate([src_boxes, pad_blk], axis=0)
            tgt_boxes_p = jnp.concatenate([tgt_boxes_m, pad_blk], axis=0)
        else:
            src_boxes_p, tgt_boxes_p = src_boxes, tgt_boxes_m

        loss_bbox, loss_giou = pl.pallas_call(
            _make_box_loss_kernel(1.0 / num_boxes),
            out_shape=(jax.ShapeDtypeStruct((1, 1), jnp.float32),
                       jax.ShapeDtypeStruct((1, 1), jnp.float32)),
            in_specs=[pl.BlockSpec(memory_space=pltpu.MemorySpace.VMEM),
                      pl.BlockSpec(memory_space=pltpu.MemorySpace.VMEM)],
            out_specs=(pl.BlockSpec(memory_space=pltpu.MemorySpace.SMEM),
                       pl.BlockSpec(memory_space=pltpu.MemorySpace.SMEM)),
            compiler_params=pltpu.CompilerParams(vmem_limit_bytes=vmem_limit),
        )(src_boxes_p, tgt_boxes_p)
        loss_bbox = loss_bbox[0, 0]
        loss_giou = loss_giou[0, 0]
    else:  # no targets in the batch
        loss_bbox = jnp.asarray(0.0, jnp.float32)
        loss_giou = jnp.asarray(0.0, jnp.float32)

    # class_error: logging metric (top-1 accuracy over matched logits)
    if m_total > 0:
        matched_logits = logits_flat[flat_idx]                      # [M, C]
        acc = (jnp.argmax(matched_logits, axis=-1).astype(jnp.int32)
               == target_classes_o).astype(jnp.float32).mean() * 100.0
        class_error = (100.0 - acc).astype(jnp.float32)
    else:
        class_error = jnp.asarray(100.0, jnp.float32)

    return {
        'loss_ce': loss_ce,
        'class_error': class_error,
        'loss_bbox': loss_bbox,
        'loss_giou': loss_giou,
    }


if __name__ == "__main__":
    key = jax.random.PRNGKey(0)
    bs, num_queries, num_classes = 2, 8, 7
    C = num_classes + 1

    k1, k2, k3, k4 = jax.random.split(key, 4)
    pred_logits = jax.random.normal(k1, (bs, num_queries, C), dtype=jnp.float32)
    cxcy = jax.random.uniform(k2, (bs, num_queries, 2), minval=0.25, maxval=0.75)
    wh = jax.random.uniform(k3, (bs, num_queries, 2), minval=0.05, maxval=0.30)
    pred_boxes = jnp.concatenate([cxcy, wh], axis=-1)               # cxcywh

    sizes = [3, 2]
    tkeys = jax.random.split(k4, 2 * len(sizes))
    targets = []
    for i, sz in enumerate(sizes):
        labels = jax.random.randint(tkeys[2 * i], (sz,), 0, num_classes)
        u = jax.random.uniform(tkeys[2 * i + 1], (sz, 4), minval=0.0, maxval=1.0)
        boxes = jnp.concatenate([0.3 + 0.4 * u[:, :2], 0.1 + 0.2 * u[:, 2:]],
                                axis=-1)
        targets.append({'labels': labels, 'boxes': boxes})

    losses = set_criterion_forward(pred_logits, pred_boxes, targets,
                                   num_classes=num_classes)
    for v in losses.values():
        jax.block_until_ready(v)
    print("KERNEL_OK")
</pallas_src>

<mosaic_0001>
module attributes {stable_mosaic.version = 11 : i64} {
  func.func @_cost_matrix_kernel(%arg0: i32, %arg1: memref<16x128xf32, #tpu.memory_space<vmem>>, %arg2: memref<16x16xf32, #tpu.memory_space<vmem>>, %arg3: memref<128x128xf32, #tpu.memory_space<vmem>>, %arg4: memref<16x128xf32, #tpu.memory_space<vmem>>, %arg5: memref<16x128xf32, #tpu.memory_space<vmem>>) attributes {dimension_semantics = [#tpu.dimension_semantics<parallel>], iteration_bounds = array<i64: 1>, scalar_prefetch = 0 : i64, scratch_operands = 0 : i64, tpu.core_type = #tpu.core_type<tc>, window_params = [{transform_indices = @transform_0, window_bounds = array<i64: 16, 128>}, {transform_indices = @transform_1, window_bounds = array<i64: 16, 16>}, {pipeline_mode = #tpu.pipeline_mode<synchronous>, transform_indices = @transform_2, window_bounds = array<i64: 128, 128>}, {pipeline_mode = #tpu.pipeline_mode<synchronous>, transform_indices = @transform_3, window_bounds = array<i64: 16, 128>}, {transform_indices = @transform_4, window_bounds = array<i64: 16, 128>}]} {
    %c0 = arith.constant 0 : index
    %c0_0 = arith.constant 0 : index
    %0 = vector.load %arg1[%c0, %c0_0] : memref<16x128xf32, #tpu.memory_space<vmem>>, vector<16x128xf32>
    %cst = arith.constant dense<0xFF800000> : vector<16xf32>
    %1 = vector.multi_reduction <maximumf>, %0, %cst [1] : vector<16x128xf32> to vector<16xf32>
    %2 = vector.shape_cast %1 : vector<16xf32> to vector<16x1xf32>
    %3 = vector.broadcast %2 : vector<16x1xf32> to vector<16x128xf32>
    %4 = arith.subf %0, %3 : vector<16x128xf32>
    %5 = math.exp %4 : vector<16x128xf32>
    %cst_1 = arith.constant dense<0.000000e+00> : vector<16xf32>
    %6 = vector.multi_reduction <add>, %5, %cst_1 [1] : vector<16x128xf32> to vector<16xf32>
    %7 = vector.shape_cast %6 : vector<16xf32> to vector<16x1xf32>
    %8 = vector.broadcast %7 : vector<16x1xf32> to vector<16x128xf32>
    %9 = arith.divf %5, %8 : vector<16x128xf32>
    %c0_2 = arith.constant 0 : index
    %c0_3 = arith.constant 0 : index
    %10 = vector.load %arg3[%c0_2, %c0_3] : memref<128x128xf32, #tpu.memory_space<vmem>>, vector<128x128xf32>
    %cst_4 = arith.constant dense<0.000000e+00> : vector<16x128xf32>
    %11 = tpu.matmul %9, %10, %cst_4 {dimension_numbers = #tpu.dot_dimension_numbers<[1], [0], [0], [1], [0, 0, 1, 1], [], []>} : vector<16x128xf32>, vector<128x128xf32>, vector<16x128xf32> -> vector<16x128xf32>
    %c0_5 = arith.constant 0 : index
    %c0_6 = arith.constant 0 : index
    %12 = vector.load %arg2[%c0_5, %c0_6] : memref<16x16xf32, #tpu.memory_space<vmem>>, vector<16x16xf32>
    %c0_7 = arith.constant 0 : index
    %c0_8 = arith.constant 0 : index
    %13 = vector.load %arg4[%c0_7, %c0_8] : memref<16x128xf32, #tpu.memory_space<vmem>>, vector<16x128xf32>
    %14 = vector.extract_strided_slice %12 {offsets = [0, 0], sizes = [16, 1], strides = [1, 1]} : vector<16x16xf32> to vector<16x1xf32>
    %15 = vector.extract_strided_slice %13 {offsets = [0, 0], sizes = [1, 128], strides = [1, 1]} : vector<16x128xf32> to vector<1x128xf32>
    %16 = vector.broadcast %14 : vector<16x1xf32> to vector<16x128xf32>
    %17 = vector.broadcast %15 : vector<1x128xf32> to vector<16x128xf32>
    %18 = arith.subf %16, %17 : vector<16x128xf32>
    %19 = math.absf %18 : vector<16x128xf32>
    %20 = vector.extract_strided_slice %12 {offsets = [0, 1], sizes = [16, 1], strides = [1, 1]} : vector<16x16xf32> to vector<16x1xf32>
    %21 = vector.extract_strided_slice %13 {offsets = [1, 0], sizes = [1, 128], strides = [1, 1]} : vector<16x128xf32> to vector<1x128xf32>
    %22 = vector.broadcast %20 : vector<16x1xf32> to vector<16x128xf32>
    %23 = vector.broadcast %21 : vector<1x128xf32> to vector<16x128xf32>
    %24 = arith.subf %22, %23 : vector<16x128xf32>
    %25 = math.absf %24 : vector<16x128xf32>
    %26 = arith.addf %19, %25 : vector<16x128xf32>
    %27 = vector.extract_strided_slice %12 {offsets = [0, 2], sizes = [16, 1], strides = [1, 1]} : vector<16x16xf32> to vector<16x1xf32>
    %28 = vector.extract_strided_slice %13 {offsets = [2, 0], sizes = [1, 128], strides = [1, 1]} : vector<16x128xf32> to vector<1x128xf32>
    %29 = vector.broadcast %27 : vector<16x1xf32> to vector<16x128xf32>
    %30 = vector.broadcast %28 : vector<1x128xf32> to vector<16x128xf32>
    %31 = arith.subf %29, %30 : vector<16x128xf32>
    %32 = math.absf %31 : vector<16x128xf32>
    %33 = arith.addf %26, %32 : vector<16x128xf32>
    %34 = vector.extract_strided_slice %12 {offsets = [0, 3], sizes = [16, 1], strides = [1, 1]} : vector<16x16xf32> to vector<16x1xf32>
    %35 = vector.extract_strided_slice %13 {offsets = [3, 0], sizes = [1, 128], strides = [1, 1]} : vector<16x128xf32> to vector<1x128xf32>
    %36 = vector.broadcast %34 : vector<16x1xf32> to vector<16x128xf32>
    %37 = vector.broadcast %35 : vector<1x128xf32> to vector<16x128xf32>
    %38 = arith.subf %36, %37 : vector<16x128xf32>
    %39 = math.absf %38 : vector<16x128xf32>
    %40 = arith.addf %33, %39 : vector<16x128xf32>
    %41 = vector.extract_strided_slice %12 {offsets = [0, 4], sizes = [16, 1], strides = [1, 1]} : vector<16x16xf32> to vector<16x1xf32>
    %42 = vector.extract_strided_slice %12 {offsets = [0, 5], sizes = [16, 1], strides = [1, 1]} : vector<16x16xf32> to vector<16x1xf32>
    %43 = vector.extract_strided_slice %12 {offsets = [0, 6], sizes = [16, 1], strides = [1, 1]} : vector<16x16xf32> to vector<16x1xf32>
    %44 = vector.extract_strided_slice %12 {offsets = [0, 7], sizes = [16, 1], strides = [1, 1]} : vector<16x16xf32> to vector<16x1xf32>
    %45 = vector.extract_strided_slice %12 {offsets = [0, 8], sizes = [16, 1], strides = [1, 1]} : vector<16x16xf32> to vector<16x1xf32>
    %46 = vector.extract_strided_slice %13 {offsets = [4, 0], sizes = [1, 128], strides = [1, 1]} : vector<16x128xf32> to vector<1x128xf32>
    %47 = vector.extract_strided_slice %13 {offsets = [5, 0], sizes = [1, 128], strides = [1, 1]} : vector<16x128xf32> to vector<1x128xf32>
    %48 = vector.extract_strided_slice %13 {offsets = [6, 0], sizes = [1, 128], strides = [1, 1]} : vector<16x128xf32> to vector<1x128xf32>
    %49 = vector.extract_strided_slice %13 {offsets = [7, 0], sizes = [1, 128], strides = [1, 1]} : vector<16x128xf32> to vector<1x128xf32>
    %50 = vector.extract_strided_slice %13 {offsets = [8, 0], sizes = [1, 128], strides = [1, 1]} : vector<16x128xf32> to vector<1x128xf32>
    %51 = vector.broadcast %43 : vector<16x1xf32> to vector<16x128xf32>
    %52 = vector.broadcast %48 : vector<1x128xf32> to vector<16x128xf32>
    %53 = arith.minimumf %51, %52 : vector<16x128xf32>
    %54 = vector.broadcast %41 : vector<16x1xf32> to vector<16x128xf32>
    %55 = vector.broadcast %46 : vector<1x128xf32> to vector<16x128xf32>
    %56 = arith.maximumf %54, %55 : vector<16x128xf32>
    %57 = arith.subf %53, %56 : vector<16x128xf32>
    %cst_9 = arith.constant 0.000000e+00 : f32
    %58 = vector.broadcast %cst_9 : f32 to vector<16x128xf32>
    %59 = arith.maximumf %57, %58 : vector<16x128xf32>
    %60 = vector.broadcast %44 : vector<16x1xf32> to vector<16x128xf32>
    %61 = vector.broadcast %49 : vector<1x128xf32> to vector<16x128xf32>
    %62 = arith.minimumf %60, %61 : vector<16x128xf32>
    %63 = vector.broadcast %42 : vector<16x1xf32> to vector<16x128xf32>
    %64 = vector.broadcast %47 : vector<1x128xf32> to vector<16x128xf32>
    %65 = arith.maximumf %63, %64 : vector<16x128xf32>
    %66 = arith.subf %62, %65 : vector<16x128xf32>
    %cst_10 = arith.constant 0.000000e+00 : f32
    %67 = vector.broadcast %cst_10 : f32 to vector<16x128xf32>
    %68 = arith.maximumf %66, %67 : vector<16x128xf32>
    %69 = arith.mulf %59, %68 : vector<16x128xf32>
    %70 = vector.broadcast %45 : vector<16x1xf32> to vector<16x128xf32>
    %71 = vector.broadcast %50 : vector<1x128xf32> to vector<16x128xf32>
    %72 = arith.addf %70, %71 : vector<16x128xf32>
    %73 = arith.subf %72, %69 : vector<16x128xf32>
    %74 = tpu.reciprocal %73 {approx = true} : vector<16x128xf32> -> vector<16x128xf32>
    %75 = arith.mulf %69, %74 : vector<16x128xf32>
    %76 = vector.broadcast %43 : vector<16x1xf32> to vector<16x128xf32>
    %77 = vector.broadcast %48 : vector<1x128xf32> to vector<16x128xf32>
    %78 = arith.maximumf %76, %77 : vector<16x128xf32>
    %79 = vector.broadcast %41 : vector<16x1xf32> to vector<16x128xf32>
    %80 = vector.broadcast %46 : vector<1x128xf32> to vector<16x128xf32>
    %81 = arith.minimumf %79, %80 : vector<16x128xf32>
    %82 = arith.subf %78, %81 : vector<16x128xf32>
    %cst_11 = arith.constant 0.000000e+00 : f32
    %83 = vector.broadcast %cst_11 : f32 to vector<16x128xf32>
    %84 = arith.maximumf %82, %83 : vector<16x128xf32>
    %85 = vector.broadcast %44 : vector<16x1xf32> to vector<16x128xf32>
    %86 = vector.broadcast %49 : vector<1x128xf32> to vector<16x128xf32>
    %87 = arith.maximumf %85, %86 : vector<16x128xf32>
    %88 = vector.broadcast %42 : vector<16x1xf32> to vector<16x128xf32>
    %89 = vector.broadcast %47 : vector<1x128xf32> to vector<16x128xf32>
    %90 = arith.minimumf %88, %89 : vector<16x128xf32>
    %91 = arith.subf %87, %90 : vector<16x128xf32>
    %cst_12 = arith.constant 0.000000e+00 : f32
    %92 = vector.broadcast %cst_12 : f32 to vector<16x128xf32>
    %93 = arith.maximumf %91, %92 : vector<16x128xf32>
    %94 = arith.mulf %84, %93 : vector<16x128xf32>
    %95 = arith.subf %94, %73 : vector<16x128xf32>
    %96 = tpu.reciprocal %94 {approx = true} : vector<16x128xf32> -> vector<16x128xf32>
    %97 = arith.mulf %95, %96 : vector<16x128xf32>
    %98 = arith.subf %75, %97 : vector<16x128xf32>
    %cst_13 = arith.constant 5.000000e+00 : f32
    %99 = vector.broadcast %cst_13 : f32 to vector<16x128xf32>
    %100 = arith.mulf %99, %40 : vector<16x128xf32>
    %cst_14 = arith.constant 1.000000e+00 : f32
    %101 = vector.broadcast %cst_14 : f32 to vector<16x128xf32>
    %102 = arith.mulf %101, %11 : vector<16x128xf32>
    %103 = arith.subf %100, %102 : vector<16x128xf32>
    %cst_15 = arith.constant 2.000000e+00 : f32
    %104 = vector.broadcast %cst_15 : f32 to vector<16x128xf32>
    %105 = arith.mulf %104, %98 : vector<16x128xf32>
    %106 = arith.subf %103, %105 : vector<16x128xf32>
    %c0_16 = arith.constant 0 : index
    %c0_17 = arith.constant 0 : index
    %107 = vector.load %arg5[%c0_16, %c0_17] : memref<16x128xf32, #tpu.memory_space<vmem>>, vector<16x128xf32>
    tpu.vector_store %arg5[%c0_16, %c0_17], %106 {strides = array<i32>} : memref<16x128xf32, #tpu.memory_space<vmem>>, vector<16x128xf32>,
    return
  }
  func.func @transform_0(%arg0: i32) -> (i32, i32) {
    %c0_i32 = arith.constant 0 : i32
    %c0_i32_0 = arith.constant 0 : i32
    return %arg0, %c0_i32 : i32, i32
  }
  func.func @transform_1(%arg0: i32) -> (i32, i32) {
    %c0_i32 = arith.constant 0 : i32
    %c0_i32_0 = arith.constant 0 : i32
    return %arg0, %c0_i32 : i32, i32
  }
  func.func @transform_2(%arg0: i32) -> (i32, i32) {
    %c0_i32 = arith.constant 0 : i32
    %c0_i32_0 = arith.constant 0 : i32
    %c0_i32_1 = arith.constant 0 : i32
    return %c0_i32, %c0_i32_0 : i32, i32
  }
  func.func @transform_3(%arg0: i32) -> (i32, i32) {
    %c0_i32 = arith.constant 0 : i32
    %c0_i32_0 = arith.constant 0 : i32
    %c0_i32_1 = arith.constant 0 : i32
    return %c0_i32, %c0_i32_0 : i32, i32
  }
  func.func @transform_4(%arg0: i32) -> (i32, i32) {
    %c0_i32 = arith.constant 0 : i32
    %c0_i32_0 = arith.constant 0 : i32
    return %arg0, %c0_i32 : i32, i32
  }
}

</mosaic_0001>

<llo_original>
// kernel: tpu_custom_call.1
$region0: #{tpu_custom_call.1}
  #allocation0 [shape = 'u32[]', space=smem, size = 0x4, offset = 0x4, fixed_abs, tag = 'smem constant byte address 0x4 - core index']
  #allocation1 [shape = 'u32[72,128]{1,0:T(1,128)}', space=vmem, size = 0x9000, scoped, tag = 'internal scratch']
  %s0 = inlined_call_operand.hbm [shape: f32[16,128], index: 0, kind: input, shape index: {}]
  %s1 = inlined_call_operand.hbm [shape: f32[16,16], index: 1, kind: input, shape index: {}]
  %s2 = inlined_call_operand.hbm [shape: f32[128,128], index: 2, kind: input, shape index: {}]
  %s3 = inlined_call_operand.hbm [shape: f32[16,128], index: 3, kind: input, shape index: {}]
  %s4 = inlined_call_operand.hbm [shape: f32[16,128], index: 4, kind: output, shape index: {}]
  %s5 = sld [smem:[#allocation0]]
  $region42: #{tpu_custom_call.1} parent=0
    _
  %s7 = ssub.s32 1, %s5
  %s8 = scalar_select 0, %s7, %s5
  $region1: #{tpu_custom_call.1} parent=0
    #allocation2 [shape = 'u8[8192]{0}', space=vmem, size = 0x2000, scoped, tag = 'input window, operand 0, single buffered']
    #allocation3 [shape = 's32[1]{0}', space=sflag, size = 0x4, scoped, tag = 'scoped memory for tpu_custom_call.1']
    #allocation4 [shape = 's32[1]{0}', space=sflag, size = 0x4, scoped, tag = 'scoped memory for tpu_custom_call.1']
    #allocation5 [shape = 'u8[8192]{0}', space=vmem, size = 0x2000, scoped, tag = 'input window, operand 1, single buffered']
    #allocation6 [shape = 's32[1]{0}', space=sflag, size = 0x4, scoped, tag = 'scoped memory for tpu_custom_call.1']
    #allocation7 [shape = 'u8[65536]{0}', space=vmem, size = 0x10000, scoped, tag = 'input window, operand 2, single buffered']
    #allocation8 [shape = 'u8[8192]{0}', space=vmem, size = 0x2000, scoped, tag = 'input window, operand 3, single buffered']
    #allocation9 [shape = 's32[1]{0}', space=sflag, size = 0x4, scoped, tag = 'scoped memory for tpu_custom_call.1']
    #allocation10 [shape = 'u8[8192]{0}', space=vmem, size = 0x2000, scoped, tag = 'output window, operand 0, single buffered']
    %9 = vsyncpa [#allocation3], 0
    %10 = vsyncpa [#allocation6], 0
    %11 = vsyncpa [#allocation9], 0
    %12 = vsyncpa [#allocation4], 0
    // Predicated region
    $region2: #{tpu_custom_call.1} parent=1 // pred_check
      _
    $region3: #{tpu_custom_call.1} parent=1 // pred_check_branch
      %14 = sbr.rel (0) target = $region5
    $region4: #{tpu_custom_call.1} parent=1 // pred_region
      %16 = vsyncadd [#allocation3], 0
      %s17 = sshll.u32 %s0, 4
      %s18 = int_to_ptr.hbm [resolvable:$true] %s17
      %s19 = sshll.u32 [#allocation2], 4
      %s20 = int_to_ptr.vmem [resolvable:$true] %s19
      %25 = dma.hbm_to_vmem [thread:$0]  %s18, 256, %s20, [#allocation3], 128, 128, 8
    $region5: #{tpu_custom_call.1} parent=1 // pred_fallthru
      _
    // Predicated region
    $region6: #{tpu_custom_call.1} parent=1 // pred_check
      _
    $region7: #{tpu_custom_call.1} parent=1 // pred_check_branch
      %27 = sbr.rel (0) target = $region9
    $region8: #{tpu_custom_call.1} parent=1 // pred_region
      %29 = vsyncadd [#allocation6], 0
      %s30 = sshll.u32 %s1, 4
      %s31 = int_to_ptr.hbm [resolvable:$true] %s30
      %s32 = sshll.u32 [#allocation5], 4
      %s33 = int_to_ptr.vmem [resolvable:$true] %s32
      %38 = dma.hbm_to_vmem [thread:$0]  %s31, 256, %s33, [#allocation6], 128, 128, 8
    $region9: #{tpu_custom_call.1} parent=1 // pred_fallthru
      _
    // Predicated region
    $region10: #{tpu_custom_call.1} parent=1 // pred_check
      _
    $region11: #{tpu_custom_call.1} parent=1 // pred_check_branch
      %40 = sbr.rel (0) target = $region13
    $region12: #{tpu_custom_call.1} parent=1 // pred_region
      %42 = vsyncadd [#allocation6], 0
      %s43 = sshll.u32 %s2, 4
      %s44 = int_to_ptr.hbm [resolvable:$true] %s43
      %s45 = sshll.u32 [#allocation7], 4
      %s46 = int_to_ptr.vmem [resolvable:$true] %s45
      %51 = dma.hbm_to_vmem [thread:$0]  %s44, 2048, %s46, [#allocation6], 128, 128, 8
    $region13: #{tpu_custom_call.1} parent=1 // pred_fallthru
      _
    // Predicated region
    $region14: #{tpu_custom_call.1} parent=1 // pred_check
      _
    $region15: #{tpu_custom_call.1} parent=1 // pred_check_branch
      %53 = sbr.rel (0) target = $region17
    $region16: #{tpu_custom_call.1} parent=1 // pred_region
      %55 = vsyncadd [#allocation9], 0
      %s56 = sshll.u32 %s3, 4
      %s57 = int_to_ptr.hbm [resolvable:$true] %s56
      %s58 = sshll.u32 [#allocation8], 4
      %s59 = int_to_ptr.vmem [resolvable:$true] %s58
      %64 = dma.hbm_to_vmem [thread:$0]  %s57, 256, %s59, [#allocation9], 128, 128, 8
    $region17: #{tpu_custom_call.1} parent=1 // pred_fallthru
      _
    // Predicated region
    $region18: #{tpu_custom_call.1} parent=1 // pred_check
      _
    $region19: #{tpu_custom_call.1} parent=1 // pred_check_branch
      %66 = sbr.rel (0) target = $region21
    $region20: #{tpu_custom_call.1} parent=1 // pred_region
      %68 = dma.done [#allocation3], 256
    $region21: #{tpu_custom_call.1} parent=1 // pred_fallthru
      _
    // Predicated region
    $region22: #{tpu_custom_call.1} parent=1 // pred_check
      _
    $region23: #{tpu_custom_call.1} parent=1 // pred_check_branch
      %70 = sbr.rel (0) target = $region25
    $region24: #{tpu_custom_call.1} parent=1 // pred_region
      %72 = dma.done [#allocation6], 256
    $region25: #{tpu_custom_call.1} parent=1 // pred_fallthru
      _
    // Predicated region
    $region26: #{tpu_custom_call.1} parent=1 // pred_check
      _
    $region27: #{tpu_custom_call.1} parent=1 // pred_check_branch
      %74 = sbr.rel (0) target = $region29
    $region28: #{tpu_custom_call.1} parent=1 // pred_region
      %76 = dma.done [#allocation6], 2048
    $region29: #{tpu_custom_call.1} parent=1 // pred_fallthru
      _
    // Predicated region
    $region30: #{tpu_custom_call.1} parent=1 // pred_check
      _
    $region31: #{tpu_custom_call.1} parent=1 // pred_check_branch
      %78 = sbr.rel (0) target = $region33
    $region32: #{tpu_custom_call.1} parent=1 // pred_region
      %80 = dma.done [#allocation9], 256
    $region33: #{tpu_custom_call.1} parent=1 // pred_fallthru
      _
    %v81 = vld [vmem:[#allocation2] sm:$0xff]
    %v82 = vld [vmem:[#allocation2 + $0x8] sm:$0xff]
    %83 = vmax.xlane.f32.xlu0 %v81
    %v84 = vpop.xlane.xlu0 %83
    %85 = vmax.xlane.f32.xlu0 %v82
    %v86 = vpop.xlane.xlu0 %85
    %v87 = vsub.f32 %v81, %v84
    %v88 = vsub.f32 %v82, %v86
    %v89 = vmul.f32 %v87, 1.442695
    %v90 = vpow.pop %v89
    %v91 = vmul.f32 %v88, 1.442695
    %v92 = vpow.pop %v91
    %93 = vadd.xlane.f32.xlu0 %v90
    %v94 = vpop.xlane.xlu0 %93
    %95 = vadd.xlane.f32.xlu0 %v92
    %v96 = vpop.xlane.xlu0 %95
    %v97 = vrcp.pop %v94
    %v98 = vmul.f32 %v94, %v97
    %v99 = vsub.f32 1.0, %v98
    %v100 = vmul.f32 %v97, %v99
    %v101 = vadd.f32 %v97, %v100
    %vm102 = vweird.f32 %v94
    %vm103 = vweird.f32 %v97
    %vm104 = vmor %vm102, %vm103
    %v105 = vsel %vm104, %v97, %v101
    %v106 = vand.u32 2147483647, %v94
    %vm107 = vcmp.eq.f32.partialorder %v106, 8.507059e+37
    %v108 = vand.u32 %v94, 2147483648
    %v109 = vor.u32 1.1754944e-38, %v108
    %v110 = vsel %vm107, %v109, %v105
    %v111 = vmul.f32 %v90, %v110
    %v112 = vrcp.pop %v96
    %v113 = vmul.f32 %v96, %v112
    %v114 = vsub.f32 1.0, %v113
    %v115 = vmul.f32 %v112, %v114
    %v116 = vadd.f32 %v112, %v115
    %vm117 = vweird.f32 %v96
    %vm118 = vweird.f32 %v112
    %vm119 = vmor %vm117, %vm118
    %v120 = vsel %vm119, %v112, %v116
    %v121 = vand.u32 2147483647, %v96
    %vm122 = vcmp.eq.f32.partialorder %v121, 8.507059e+37
    %v123 = vand.u32 %v96, 2147483648
    %v124 = vor.u32 1.1754944e-38, %v123
    %v125 = vsel %vm122, %v124, %v120
    %v126 = vmul.f32 %v92, %v125
    %v127 = vld [vmem:[#allocation7] sm:$0xff]
    %v128 = vld [vmem:[#allocation7 + $0x8] sm:$0xff]
    %v129 = vld [vmem:[#allocation7 + $0x10] sm:$0xff]
    %v130 = vld [vmem:[#allocation7 + $0x18] sm:$0xff]
    %v131 = vld [vmem:[#allocation7 + $0x20] sm:$0xff]
    %v132 = vld [vmem:[#allocation7 + $0x28] sm:$0xff]
    %v133 = vld [vmem:[#allocation7 + $0x30] sm:$0xff]
    %v134 = vld [vmem:[#allocation7 + $0x38] sm:$0xff]
    %v135 = vld [vmem:[#allocation7 + $0x40] sm:$0xff]
    %v136 = vld [vmem:[#allocation7 + $0x48] sm:$0xff]
    %v137 = vld [vmem:[#allocation7 + $0x50] sm:$0xff]
    %v138 = vld [vmem:[#allocation7 + $0x58] sm:$0xff]
    %v139 = vld [vmem:[#allocation7 + $0x60] sm:$0xff]
    %v140 = vld [vmem:[#allocation7 + $0x68] sm:$0xff]
    %v141 = vld [vmem:[#allocation7 + $0x70] sm:$0xff]
    %v142 = vld [vmem:[#allocation7 + $0x78] sm:$0xff]
    %143 = vmatpush.msra.mxu0 %v142
    %144 = vmatpush.msra.mxu0 %v141
    %145 = vmatpush.msra.mxu0 %v140
    %146 = vmatpush.msra.mxu0 %v139
    %147 = vmatpush.msra.mxu0 %v138
    %148 = vmatpush.msra.mxu0 %v137
    %149 = vmatpush.msra.mxu0 %v136
    %150 = vmatpush.msra.mxu0 %v135
    %151 = vmatpush.msra.mxu0 %v134
    %152 = vmatpush.msra.mxu0 %v133
    %153 = vmatpush.msra.mxu0 %v132
    %154 = vmatpush.msra.mxu0 %v131
    %155 = vmatpush.msra.mxu0 %v130
    %156 = vmatpush.msra.mxu0 %v129
    %157 = vmatpush.msra.mxu0 %v128
    %158 = vmatpush.msra.mxu0 %v127
    %159 = vmatmul.f32.gmra.mxu0 %v111
    %v160 = vpop.f32.mrf.mxu0
    %v161 = vadd.f32 0.0, %v160
    %162 = vmatmul.f32.gmra.mxu0 %v126
    %v163 = vpop.f32.mrf.mxu0
    %v164 = vadd.f32 0.0, %v163
    %165 = vdwg.mxu0
    %v166 = vld [vmem:[#allocation5] sm:$0xff]
    %v167 = vld [vmem:[#allocation5 + $0x8] sm:$0xff]
    %v168 = vld [vmem:[#allocation8] sm:$0xff]
    %v169 = vld [vmem:[#allocation8 + $0x8] sm:$0xff]
    %171 = vset.pattern.permute.xlu0 0
    %172 = vperm.xlu0 %171, %v166
    %v173 = vpop.permute.xlu0 %172
    %176 = vset.pattern.permute.xlu0 0
    %177 = vperm.xlu0 %176, %v167
    %v178 = vpop.permute.xlu0 %177
    %v180 = vperm.slane %v168, 0
    %v181 = vsub.f32 %v173, %v180
    %v182 = vsub.f32 %v178, %v180
    %v183 = vand.u32 2147483647, %v181
    %v184 = vand.u32 2147483647, %v182
    %185 = vset.pattern.permute.xlu0 1
    %186 = vperm.xlu0 %185, %v166
    %v187 = vpop.permute.xlu0 %186
    %189 = vset.pattern.permute.xlu0 1
    %190 = vperm.xlu0 %189, %v167
    %v191 = vpop.permute.xlu0 %190
    %v193 = vperm.slane %v168, 1
    %v194 = vsub.f32 %v187, %v193
    %v195 = vsub.f32 %v191, %v193
    %v196 = vand.u32 2147483647, %v194
    %v197 = vand.u32 2147483647, %v195
    %v198 = vadd.f32 %v183, %v196
    %v199 = vadd.f32 %v184, %v197
    %200 = vset.pattern.permute.xlu0 2
    %201 = vperm.xlu0 %200, %v166
    %v202 = vpop.permute.xlu0 %201
    %204 = vset.pattern.permute.xlu0 2
    %205 = vperm.xlu0 %204, %v167
    %v206 = vpop.permute.xlu0 %205
    %v208 = vperm.slane %v168, 2
    %v209 = vsub.f32 %v202, %v208
    %v210 = vsub.f32 %v206, %v208
    %v211 = vand.u32 2147483647, %v209
    %v212 = vand.u32 2147483647, %v210
    %v213 = vadd.f32 %v198, %v211
    %v214 = vadd.f32 %v199, %v212
    %215 = vset.pattern.permute.xlu0 3
    %216 = vperm.xlu0 %215, %v166
    %v217 = vpop.permute.xlu0 %216
    %219 = vset.pattern.permute.xlu0 3
    %220 = vperm.xlu0 %219, %v167
    %v221 = vpop.permute.xlu0 %220
    %v223 = vperm.slane %v168, 3
    %v224 = vsub.f32 %v217, %v223
    %v225 = vsub.f32 %v221, %v223
    %v226 = vand.u32 2147483647, %v224
    %v227 = vand.u32 2147483647, %v225
    %v228 = vadd.f32 %v213, %v226
    %v229 = vadd.f32 %v214, %v227
    %230 = vset.pattern.permute.xlu0 6
    %231 = vperm.xlu0 %230, %v166
    %v232 = vpop.permute.xlu0 %231
    %234 = vset.pattern.permute.xlu0 6
    %235 = vperm.xlu0 %234, %v167
    %v236 = vpop.permute.xlu0 %235
    %v238 = vperm.slane %v168, 6
    %v239 = vmin.f32 %v232, %v238
    %v240 = vmin.f32 %v236, %v238
    %241 = vset.pattern.permute.xlu0 4
    %242 = vperm.xlu0 %241, %v166
    %v243 = vpop.permute.xlu0 %242
    %245 = vset.pattern.permute.xlu0 4
    %246 = vperm.xlu0 %245, %v167
    %v247 = vpop.permute.xlu0 %246
    %v249 = vperm.slane %v168, 4
    %v250 = vmax.f32 %v243, %v249
    %v251 = vmax.f32 %v247, %v249
    %v252 = vsub.f32 %v239, %v250
    %v253 = vsub.f32 %v240, %v251
    %v254 = vmax.f32 %v252, 0.0
    %v255 = vmax.f32 %v253, 0.0
    %256 = vset.pattern.permute.xlu0 7
    %257 = vperm.xlu0 %256, %v166
    %v258 = vpop.permute.xlu0 %257
    %260 = vset.pattern.permute.xlu0 7
    %261 = vperm.xlu0 %260, %v167
    %v262 = vpop.permute.xlu0 %261
    %v264 = vperm.slane %v168, 7
    %v265 = vmin.f32 %v258, %v264
    %v266 = vmin.f32 %v262, %v264
    %267 = vset.pattern.permute.xlu0 5
    %268 = vperm.xlu0 %267, %v166
    %v269 = vpop.permute.xlu0 %268
    %271 = vset.pattern.permute.xlu0 5
    %272 = vperm.xlu0 %271, %v167
    %v273 = vpop.permute.xlu0 %272
    %v275 = vperm.slane %v168, 5
    %v276 = vmax.f32 %v269, %v275
    %v277 = vmax.f32 %v273, %v275
    %v278 = vsub.f32 %v265, %v276
    %v279 = vsub.f32 %v266, %v277
    %v280 = vmax.f32 %v278, 0.0
    %v281 = vmax.f32 %v279, 0.0
    %v282 = vmul.f32 %v254, %v280
    %v283 = vmul.f32 %v255, %v281
    %284 = vset.pattern.permute.xlu0 8
    %285 = vperm.xlu0 %284, %v166
    %v286 = vpop.permute.xlu0 %285
    %288 = vset.pattern.permute.xlu0 8
    %289 = vperm.xlu0 %288, %v167
    %v290 = vpop.permute.xlu0 %289
    %v292 = vperm.slane %v169, 0
    %v293 = vadd.f32 %v286, %v292
    %v294 = vadd.f32 %v290, %v292
    %v295 = vsub.f32 %v293, %v282
    %v296 = vsub.f32 %v294, %v283
    %v297 = vrcp.pop %v295
    %v298 = vrcp.pop %v296
    %v299 = vmul.f32 %v282, %v297
    %v300 = vmul.f32 %v283, %v298
    %v301 = vmax.f32 %v232, %v238
    %v302 = vmax.f32 %v236, %v238
    %v303 = vmin.f32 %v243, %v249
    %v304 = vmin.f32 %v247, %v249
    %v305 = vsub.f32 %v301, %v303
    %v306 = vsub.f32 %v302, %v304
    %v307 = vmax.f32 %v305, 0.0
    %v308 = vmax.f32 %v306, 0.0
    %v309 = vmax.f32 %v258, %v264
    %v310 = vmax.f32 %v262, %v264
    %v311 = vmin.f32 %v269, %v275
    %v312 = vmin.f32 %v273, %v275
    %v313 = vsub.f32 %v309, %v311
    %v314 = vsub.f32 %v310, %v312
    %v315 = vmax.f32 %v313, 0.0
    %v316 = vmax.f32 %v314, 0.0
    %v317 = vmul.f32 %v307, %v315
    %v318 = vmul.f32 %v308, %v316
    %v319 = vsub.f32 %v317, %v295
    %v320 = vsub.f32 %v318, %v296
    %v321 = vrcp.pop %v317
    %v322 = vrcp.pop %v318
    %v323 = vmul.f32 %v319, %v321
    %v324 = vmul.f32 %v320, %v322
    %v325 = vsub.f32 %v299, %v323
    %v326 = vsub.f32 %v300, %v324
    %v327 = vmul.f32 %v228, 5.0
    %v328 = vmul.f32 %v229, 5.0
    %v329 = vsub.f32 %v327, %v161
    %v330 = vsub.f32 %v328, %v164
    %v331 = vmul.f32 %v325, 2.0
    %v332 = vmul.f32 %v326, 2.0
    %v333 = vsub.f32 %v329, %v331
    %v334 = vsub.f32 %v330, %v332
    %335 = vst [vmem:[#allocation10] sm:$0xff] %v333
    %336 = vst [vmem:[#allocation10 + $0x8] sm:$0xff] %v334
    // Predicated region
    $region34: #{tpu_custom_call.1} parent=1 // pred_check
      _
    $region35: #{tpu_custom_call.1} parent=1 // pred_check_branch
      %338 = sbr.rel (0) target = $region37
    $region36: #{tpu_custom_call.1} parent=1 // pred_region
      %340 = vsyncadd [#allocation4], 0
      %s341 = sshll.u32 [#allocation10], 4
      %s342 = int_to_ptr.vmem [resolvable:$true] %s341
      %s343 = sshll.u32 %s4, 4
      %s344 = int_to_ptr.hbm [resolvable:$true] %s343
      %349 = dma.vmem_to_hbm [thread:$0]  %s342, 256, %s344, [#allocation4], 128, 128, 8
    $region37: #{tpu_custom_call.1} parent=1 // pred_fallthru
      _
    // Predicated region
    $region38: #{tpu_custom_call.1} parent=1 // pred_check
      _
    $region39: #{tpu_custom_call.1} parent=1 // pred_check_branch
      %351 = sbr.rel (0) target = $region41
    $region40: #{tpu_custom_call.1} parent=1 // pred_region
      %353 = dma.done [#allocation4], 256
    $region41: #{tpu_custom_call.1} parent=1 // pred_fallthru
      _
    %354 = vsyncpa [#allocation3], 1
    %355 = vsyncpa [#allocation6], 1
    %356 = vsyncpa [#allocation9], 1
    %357 = vsyncpa [#allocation4], 1

</llo_original>
